<compile_context>
chip_gen: v5e
topology: v5e:2x2
jax: 0.10.0
libtpu: 0.0.40
codegen_flags: <defaults>
</compile_context>

<pallas_src>
import math

import jax
import jax.numpy as jnp
from jax.experimental import pallas as pl
from jax.experimental.pallas import tpu as pltpu

_LANE = 128
_SUBLANE = 8
_VMEM_LIMIT = 32 * 1024 * 1024          # safe on v5e/v6e (128 MiB) and v7x (64 MiB)
_FUSE_MAX_F32_BYTES = 4 * 1024 * 1024   # fused path only when x (as f32) <= 4 MiB


# --------------------------- chip / tiling helpers -------------------------- #

def _chip_info():
    """Best-effort per-generation tuning knobs (defensive: default = 1 TC)."""
    kind = ""
    try:
        kind = jax.devices()[0].device_kind.lower()
    except Exception:
        pass
    if "v7" in kind:      # 2 TensorCores / chip, 3.2 TB/s HBM, 64 MiB VMEM
        return {"cores": 2, "tile_bytes": 4 << 20, "row_cap": 4096}
    return {"cores": 1, "tile_bytes": 2 << 20, "row_cap": 2048}


def _lane_pack_factor(feat):
    """Smallest r such that (r * feat) % 128 == 0."""
    if feat % _LANE == 0:
        return 1
    return _LANE // math.gcd(feat, _LANE)


def _pack_rows(x):
    """Flatten leading dims and repack to a lane-dense (R, C = r*F) layout.

    Rows are zero-padded to a multiple of r so the packing never falls back to
    a narrow (masked vst) layout.  Returns (xp, R, C, r, rows) with `rows` the
    original (unpadded) row count.
    """
    F = x.shape[-1]
    rows = math.prod(x.shape[:-1])
    r = _lane_pack_factor(F)
    rows_p = ((rows + r - 1) // r) * r
    x2 = x.reshape(rows, F)
    if rows_p != rows:
        x2 = jnp.pad(x2, ((0, rows_p - rows), (0, 0)))
    R, C = rows_p // r, r * F
    return x2.reshape(R, C), R, C, r, rows


def _choose_bm(rows, cols, itemsize, tile_bytes, row_cap):
    """Row-tile size: as big as the per-buffer budget allows, multiple of 8."""
    bm = max(1, tile_bytes // max(1, cols * int(itemsize)))
    bm = min(bm, row_cap, rows)
    if bm >= rows:
        return rows                      # full extent (allowed even if not %8)
    return max(_SUBLANE, (bm // _SUBLANE) * _SUBLANE)


# ------------------------------ fused path ---------------------------------- #

def _make_fused_call(R, C, F, r, in_dtype):
    """One pallas_call: x resident in VMEM -> (normalized, batch sum, batch sq)."""

    def kernel(x_ref, asum_ref, asq_ref, sc_ref, o_ref, dsum_ref, dsq_ref):
        x = x_ref[...].astype(jnp.float32)                         # (R, C)
        s = jnp.sum(x, axis=0, keepdims=True)                      # (1, C)
        q = jnp.sum(x * x, axis=0, keepdims=True)                  # (1, C)
        # Collapse the r lane-folds: summing all r rotations by multiples of F
        # puts the full per-feature total in every fold (tile(sum_F, r)).
        t_s, t_q = s, q
        for i in range(1, r):
            t_s = t_s + pltpu.roll(s, shift=i * F, axis=1)
            t_q = t_q + pltpu.roll(q, shift=i * F, axis=1)
        dsum_ref[...] = t_s
        dsq_ref[...] = t_q

        recip = sc_ref[0]                # 1 / max(new_count, 1)
        eps = sc_ref[1]                  # std_epsilon
        mean = (asum_ref[...] + t_s) * recip                       # (1, C)
        var = jnp.maximum((asq_ref[...] + t_q) * recip - mean * mean,
                          jnp.float32(0.0))
        std = jnp.maximum(jnp.sqrt(var), eps)
        inv = jnp.float32(1.0) / std                               # exact, tiny
        o_ref[...] = (x - mean) * inv

    nbytes = R * C * (int(jnp.dtype(in_dtype).itemsize) + 4) + 8 * C * 4
    return pl.pallas_call(
        kernel,
        out_shape=(jax.ShapeDtypeStruct((R, C), jnp.float32),
                   jax.ShapeDtypeStruct((1, C), jnp.float32),
                   jax.ShapeDtypeStruct((1, C), jnp.float32)),
        in_specs=[pl.BlockSpec(memory_space=pltpu.MemorySpace.VMEM),   # x
                  pl.BlockSpec(memory_space=pltpu.MemorySpace.VMEM),   # acc_sum (1,C)
                  pl.BlockSpec(memory_space=pltpu.MemorySpace.VMEM),   # acc_sq  (1,C)
                  pl.BlockSpec(memory_space=pltpu.MemorySpace.SMEM)],  # scalars (2,)
        out_specs=(pl.BlockSpec(memory_space=pltpu.MemorySpace.VMEM),
                   pl.BlockSpec(memory_space=pltpu.MemorySpace.VMEM),
                   pl.BlockSpec(memory_space=pltpu.MemorySpace.VMEM)),
        compiler_params=pltpu.CompilerParams(vmem_limit_bytes=_VMEM_LIMIT),
        cost_estimate=pl.CostEstimate(flops=6 * R * C, transcendentals=C,
                                      bytes_accessed=nbytes),
    )


@jax.jit
def _fused_forward(x, acc_sum, acc_sum_squared, acc_count, std_epsilon):
    """Fused accumulate + normalize for VMEM-resident inputs."""
    xp, R, C, r, rows = _pack_rows(x)
    F = x.shape[-1]
    new_count = jnp.asarray(acc_count, jnp.float32) + jnp.float32(rows)
    recip = jnp.float32(1.0) / jnp.maximum(new_count, jnp.float32(1.0))
    scalars = jnp.stack([recip, jnp.asarray(std_epsilon, jnp.float32)])
    asum_c = jnp.tile(acc_sum, (1, r))
    asq_c = jnp.tile(acc_sum_squared, (1, r))

    out, dsum_c, dsq_c = _make_fused_call(R, C, F, r, x.dtype)(
        xp, asum_c, asq_c, scalars)
    out = out.reshape(R * r, F)[:rows].reshape(x.shape)
    return out, dsum_c[:, :F], dsq_c[:, :F]


# ----------------------------- accumulate ----------------------------------- #

def _make_accum_call(R, C, bm, NC, SPC, in_dtype):
    """sum / sum-of-squares over rows of an (R, C) array -> two (NC, 8, C)."""
    R_blocks = pl.cdiv(R, bm)
    need_mask = (NC * SPC * bm) > R      # tail block and/or clamped duplicates

    def _accum(sum_ref, sq_ref, xv):
        if bm % _SUBLANE == 0:
            # Defer the cross-sublane reduce: pure VPU adds into (8, C).
            xr = xv.reshape(bm // _SUBLANE, _SUBLANE, C)
            sum_ref[...] += jnp.sum(xr, axis=0)
            sq_ref[...] += jnp.sum(xr * xr, axis=0)
        else:
            # Tiny single-block case (bm == R < 8 rows).
            sum_ref[0:1, :] += jnp.sum(xv, axis=0, keepdims=True)
            sq_ref[0:1, :] += jnp.sum(xv * xv, axis=0, keepdims=True)

    def kernel(x_ref, sum_ref, sq_ref):
        @pl.when(pl.program_id(1) == 0)
        def _():
            sum_ref[...] = jnp.zeros_like(sum_ref)
            sq_ref[...] = jnp.zeros_like(sq_ref)

        x = x_ref[...].astype(jnp.float32)                        # (bm, C)
        if need_mask:
            step = pl.program_id(0) * SPC + pl.program_id(1)
            base = step * bm

            # Interior blocks: cheap path, no iota / where.
            @pl.when(base + bm <= R)
            def _():
                _accum(sum_ref, sq_ref, x)

            # Final real block and clamped duplicate steps: mask rows >= R.
            @pl.when(base + bm > R)
            def _():
                row = base + jax.lax.broadcasted_iota(jnp.int32, (bm, C), 0)
                _accum(sum_ref, sq_ref,
                       jnp.where(row < R, x, jnp.float32(0.0)))
        else:
            _accum(sum_ref, sq_ref, x)

    x_map = lambda c, i: (jnp.minimum(c * SPC + i, R_blocks - 1), 0)
    out_map = lambda c, i: (c, 0, 0)

    nbytes = R * C * int(jnp.dtype(in_dtype).itemsize) + 2 * NC * _SUBLANE * C * 4
    return pl.pallas_call(
        kernel,
        out_shape=(jax.ShapeDtypeStruct((NC, _SUBLANE, C), jnp.float32),
                   jax.ShapeDtypeStruct((NC, _SUBLANE, C), jnp.float32)),
        grid=(NC, SPC),
        in_specs=[pl.BlockSpec((bm, C), x_map)],
        out_specs=(pl.BlockSpec((None, _SUBLANE, C), out_map),
                   pl.BlockSpec((None, _SUBLANE, C), out_map)),
        compiler_params=pltpu.CompilerParams(
            dimension_semantics=("parallel", "arbitrary"),
            vmem_limit_bytes=_VMEM_LIMIT),
        cost_estimate=pl.CostEstimate(flops=3 * R * C, transcendentals=0,
                                      bytes_accessed=nbytes),
    )


@jax.jit
def _accumulate_sums(x):
    """Per-feature sum / sum-of-squares over all leading dims of x[..., F]."""
    xp, R, C, r, _rows = _pack_rows(x)
    F = x.shape[-1]
    info = _chip_info()

    bm = _choose_bm(R, C, jnp.dtype(x.dtype).itemsize,
                    info["tile_bytes"], info["row_cap"])
    R_blocks = pl.cdiv(R, bm)
    NC = 2 if (info["cores"] >= 2 and R_blocks >= 2) else 1   # v7x: both TCs
    SPC = pl.cdiv(R_blocks, NC)

    s8, q8 = _make_accum_call(R, C, bm, NC, SPC, x.dtype)(xp)
    data_sum = jnp.sum(s8.reshape(NC * _SUBLANE * r, F), axis=0, keepdims=True)
    sq_sum = jnp.sum(q8.reshape(NC * _SUBLANE * r, F), axis=0, keepdims=True)
    return data_sum, sq_sum


# ----------------------------- normalize ------------------------------------ #

def _make_normalize_call(R, C, bm, in_dtype):
    def kernel(x_ref, mean_ref, inv_ref, o_ref):
        x = x_ref[...].astype(jnp.float32)
        o_ref[...] = (x - mean_ref[...]) * inv_ref[...]

    nbytes = R * C * (int(jnp.dtype(in_dtype).itemsize) + 4) + 2 * C * 4
    return pl.pallas_call(
        kernel,
        out_shape=jax.ShapeDtypeStruct((R, C), jnp.float32),
        grid=(pl.cdiv(R, bm),),
        in_specs=[pl.BlockSpec((bm, C), lambda i: (i, 0)),
                  pl.BlockSpec((1, C), lambda i: (0, 0)),
                  pl.BlockSpec((1, C), lambda i: (0, 0))],
        out_specs=pl.BlockSpec((bm, C), lambda i: (i, 0)),
        compiler_params=pltpu.CompilerParams(
            dimension_semantics=("parallel",),
            vmem_limit_bytes=_VMEM_LIMIT),
        cost_estimate=pl.CostEstimate(flops=2 * R * C, transcendentals=0,
                                      bytes_accessed=nbytes),
    )


@jax.jit
def _normalize(x, acc_sum, acc_sum_squared, acc_count, std_epsilon):
    """(x - mean) / std_with_epsilon, broadcast over the feature axis."""
    xp, R, C, r, rows = _pack_rows(x)
    F = x.shape[-1]

    # Stats are tiny: compute mean / inv_std once in plain JAX, tile to lanes.
    safe = jnp.maximum(jnp.asarray(acc_count, jnp.float32), jnp.float32(1.0))
    mean = acc_sum / safe                                        # (1, F)
    var = jnp.maximum(acc_sum_squared / safe - mean * mean, jnp.float32(0.0))
    std = jnp.maximum(jnp.sqrt(var), jnp.asarray(std_epsilon, jnp.float32))
    inv_std = jnp.float32(1.0) / std
    mean_p = jnp.tile(mean, (1, r))                              # (1, C)
    inv_p = jnp.tile(inv_std, (1, r))                            # (1, C)

    info = _chip_info()
    bm = _choose_bm(R, C, max(jnp.dtype(x.dtype).itemsize, 4),
                    info["tile_bytes"], info["row_cap"])
    # v7x: make sure both TensorCores get a block when the array is non-trivial.
    if info["cores"] >= 2 and pl.cdiv(R, bm) < 2 and R >= 2 * _SUBLANE:
        bm = max(_SUBLANE, ((R // 2) // _SUBLANE) * _SUBLANE)

    out = _make_normalize_call(R, C, bm, x.dtype)(xp, mean_p, inv_p)
    return out.reshape(R * r, F)[:rows].reshape(x.shape)


# ------------------------------ module -------------------------------------- #

class Normalizer:
    """JAX/Pallas port of the PyTorch Normalizer (forward / accumulate / inverse)."""

    def __init__(self, size, std_epsilon=1e-8, name="Normalizer"):
        self.name = name
        self._std_epsilon = jnp.float32(std_epsilon)
        self._acc_count = jnp.float32(0.0)
        self._num_accumulations = jnp.float32(0.0)
        self._acc_sum = jnp.zeros((1, size), jnp.float32)
        self._acc_sum_squared = jnp.zeros((1, size), jnp.float32)

    def __call__(self, batched_data, accumulate=False):
        if accumulate:
            return self._accumulate_and_normalize(batched_data)
        return _normalize(batched_data, self._acc_sum, self._acc_sum_squared,
                          self._acc_count, self._std_epsilon)

    forward = __call__

    def inverse(self, normalized_batch_data):
        safe = jnp.maximum(self._acc_count, 1.0)
        mean = self._acc_sum / safe
        std = jnp.maximum(
            jnp.sqrt(jnp.maximum(self._acc_sum_squared / safe - mean * mean, 0.0)),
            self._std_epsilon)
        return normalized_batch_data * std + mean

    def _accumulate_and_normalize(self, batched_data):
        batch_size = batched_data.shape[0]
        rows = math.prod(batched_data.shape[:-1])   # == batch * points for 3-D input
        f32_bytes = rows * batched_data.shape[-1] * 4

        out = None
        if f32_bytes <= _FUSE_MAX_F32_BYTES:
            out, data_sum, squared_data_sum = _fused_forward(
                batched_data, self._acc_sum, self._acc_sum_squared,
                self._acc_count, self._std_epsilon)
        else:
            data_sum, squared_data_sum = _accumulate_sums(batched_data)

        self._acc_sum = self._acc_sum + data_sum
        self._acc_sum_squared = self._acc_sum_squared + squared_data_sum
        self._acc_count = self._acc_count + jnp.float32(rows)
        self._num_accumulations = self._num_accumulations + jnp.float32(batch_size)

        if out is None:
            out = _normalize(batched_data, self._acc_sum, self._acc_sum_squared,
                             self._acc_count, self._std_epsilon)
        return out

    def get_variable(self):
        return {'_std_epsilon': self._std_epsilon,
                '_acc_count': self._acc_count,
                '_num_accumulations': self._num_accumulations,
                '_acc_sum': self._acc_sum,
                '_acc_sum_squared': self._acc_sum_squared,
                'name': self.name}

    # TODO(synk): save_variable / load_variable (torch.save/torch.load file I/O)
    # intentionally omitted — no file access in this environment.


# ------------------------------ reference ----------------------------------- #

def _ref_forward(x, acc_sum, acc_sq, count, eps):
    safe = jnp.maximum(count, 1.0)
    mean = acc_sum / safe
    std = jnp.maximum(jnp.sqrt(jnp.maximum(acc_sq / safe - mean ** 2, 0.0)), eps)
    return (x - mean) / std


if __name__ == "__main__":
    k1, k2, k3 = jax.random.split(jax.random.PRNGKey(0), 3)

    # --- 1) small (batch=2, points=8, features=32): fused path, r=4 packing --
    B, N, F = 2, 8, 32
    x = jax.random.normal(k1, (B, N, F), dtype=jnp.float32) * 3.0 + 1.5

    norm = Normalizer(size=F)
    out = jax.block_until_ready(norm(x, accumulate=True))
    ref = _ref_forward(x, norm._acc_sum, norm._acc_sum_squared,
                       norm._acc_count, norm._std_epsilon)
    assert out.shape == x.shape and out.dtype == jnp.float32
    assert jnp.allclose(out, ref, atol=1e-4, rtol=1e-4), "fused forward mismatch"

    xs = x.reshape(-1, F)
    assert jnp.allclose(norm._acc_sum, jnp.sum(xs, 0, keepdims=True),
                        rtol=1e-5, atol=1e-3), "fused acc_sum"
    assert jnp.allclose(norm._acc_sum_squared, jnp.sum(xs * xs, 0, keepdims=True),
                        rtol=1e-5, atol=1e-2), "fused acc_sum_squared"

    out2 = jax.block_until_ready(norm(x, accumulate=False))   # normalize kernel
    assert jnp.allclose(out2, ref, atol=1e-4, rtol=1e-4), "frozen-stats mismatch"
    assert jnp.allclose(norm.inverse(out2), x, atol=1e-3, rtol=1e-3), "inverse"

    # --- 2) rows (3*7=21) not a multiple of the pack factor: padding path ----
    Bp, Np, Fp = 3, 7, 32
    xp = jax.random.normal(k2, (Bp, Np, Fp), dtype=jnp.float32) - 0.3
    normp = Normalizer(size=Fp)
    outp = jax.block_until_ready(normp(xp, accumulate=True))
    refp = _ref_forward(xp, normp._acc_sum, normp._acc_sum_squared,
                        normp._acc_count, normp._std_epsilon)
    assert jnp.allclose(outp, refp, atol=1e-4, rtol=1e-4), "padded-rows mismatch"

    # --- 3) larger array, forced non-fused path: multi-block grid + tail mask -
    B2, N2, F2 = 4, 3000, 32
    x2 = jax.random.normal(k3, (B2, N2, F2), dtype=jnp.float32) * 2.0 - 0.7

    dsum, dsq = _accumulate_sums(x2)
    exp_sum = jnp.sum(x2.reshape(-1, F2), axis=0, keepdims=True)
    exp_sq = jnp.sum(x2.reshape(-1, F2) ** 2, axis=0, keepdims=True)
    assert jnp.allclose(dsum, exp_sum, rtol=1e-3, atol=1e-2), "acc_sum (tiled)"
    assert jnp.allclose(dsq, exp_sq, rtol=1e-3, atol=1e-1), "acc_sq (tiled)"

    count = jnp.float32(B2 * N2)
    out3 = jax.block_until_ready(
        _normalize(x2, dsum, dsq, count, jnp.float32(1e-8)))
    ref3 = _ref_forward(x2, dsum, dsq, count, jnp.float32(1e-8))
    assert jnp.allclose(out3, ref3, atol=1e-4, rtol=1e-4), "tiled normalize mismatch"

    print("KERNEL_OK")
</pallas_src>

<mosaic_0001>
module attributes {stable_mosaic.version = 11 : i64} {
  func.func @kernel(%arg0: memref<4x128xf32, #tpu.memory_space<vmem>>, %arg1: memref<1x128xf32, #tpu.memory_space<vmem>>, %arg2: memref<1x128xf32, #tpu.memory_space<vmem>>, %arg3: memref<2xf32, #tpu.memory_space<smem>>, %arg4: memref<4x128xf32, #tpu.memory_space<vmem>>, %arg5: memref<1x128xf32, #tpu.memory_space<vmem>>, %arg6: memref<1x128xf32, #tpu.memory_space<vmem>>) attributes {dimension_semantics = [], scalar_prefetch = 0 : i64, scratch_operands = 0 : i64, tpu.core_type = #tpu.core_type<tc>} {
    %c0 = arith.constant 0 : index
    %c0_0 = arith.constant 0 : index
    %0 = vector.load %arg0[%c0, %c0_0] : memref<4x128xf32, #tpu.memory_space<vmem>>, vector<4x128xf32>
    %cst = arith.constant dense<0.000000e+00> : vector<128xf32>
    %1 = vector.multi_reduction <add>, %0, %cst [0] : vector<4x128xf32> to vector<128xf32>
    %2 = vector.shape_cast %1 : vector<128xf32> to vector<1x128xf32>
    %3 = arith.mulf %0, %0 : vector<4x128xf32>
    %cst_1 = arith.constant dense<0.000000e+00> : vector<128xf32>
    %4 = vector.multi_reduction <add>, %3, %cst_1 [0] : vector<4x128xf32> to vector<128xf32>
    %5 = vector.shape_cast %4 : vector<128xf32> to vector<1x128xf32>
    %c32_i32 = arith.constant 32 : i32
    %6 = tpu.dynamic_rotate %2 by %c32_i32 dim 1 : vector<1x128xf32>, i32 -> vector<1x128xf32>
    %7 = arith.addf %2, %6 : vector<1x128xf32>
    %c32_i32_2 = arith.constant 32 : i32
    %8 = tpu.dynamic_rotate %5 by %c32_i32_2 dim 1 : vector<1x128xf32>, i32 -> vector<1x128xf32>
    %9 = arith.addf %5, %8 : vector<1x128xf32>
    %c64_i32 = arith.constant 64 : i32
    %10 = tpu.dynamic_rotate %2 by %c64_i32 dim 1 : vector<1x128xf32>, i32 -> vector<1x128xf32>
    %11 = arith.addf %7, %10 : vector<1x128xf32>
    %c64_i32_3 = arith.constant 64 : i32
    %12 = tpu.dynamic_rotate %5 by %c64_i32_3 dim 1 : vector<1x128xf32>, i32 -> vector<1x128xf32>
    %13 = arith.addf %9, %12 : vector<1x128xf32>
    %c96_i32 = arith.constant 96 : i32
    %14 = tpu.dynamic_rotate %2 by %c96_i32 dim 1 : vector<1x128xf32>, i32 -> vector<1x128xf32>
    %15 = arith.addf %11, %14 : vector<1x128xf32>
    %c96_i32_4 = arith.constant 96 : i32
    %16 = tpu.dynamic_rotate %5 by %c96_i32_4 dim 1 : vector<1x128xf32>, i32 -> vector<1x128xf32>
    %17 = arith.addf %13, %16 : vector<1x128xf32>
    %c0_5 = arith.constant 0 : index
    %c0_6 = arith.constant 0 : index
    %18 = vector.load %arg5[%c0_5, %c0_6] : memref<1x128xf32, #tpu.memory_space<vmem>>, vector<1x128xf32>
    tpu.vector_store %arg5[%c0_5, %c0_6], %15 {strides = array<i32>} : memref<1x128xf32, #tpu.memory_space<vmem>>, vector<1x128xf32>,
    %c0_7 = arith.constant 0 : index
    %c0_8 = arith.constant 0 : index
    %19 = vector.load %arg6[%c0_7, %c0_8] : memref<1x128xf32, #tpu.memory_space<vmem>>, vector<1x128xf32>
    tpu.vector_store %arg6[%c0_7, %c0_8], %17 {strides = array<i32>} : memref<1x128xf32, #tpu.memory_space<vmem>>, vector<1x128xf32>,
    %c0_9 = arith.constant 0 : index
    %20 = memref.load %arg3[%c0_9] : memref<2xf32, #tpu.memory_space<smem>>
    %c1 = arith.constant 1 : index
    %21 = memref.load %arg3[%c1] : memref<2xf32, #tpu.memory_space<smem>>
    %c0_10 = arith.constant 0 : index
    %c0_11 = arith.constant 0 : index
    %22 = vector.load %arg1[%c0_10, %c0_11] : memref<1x128xf32, #tpu.memory_space<vmem>>, vector<1x128xf32>
    %23 = arith.addf %22, %15 : vector<1x128xf32>
    %24 = vector.broadcast %20 : f32 to vector<1x128xf32>
    %25 = arith.mulf %23, %24 : vector<1x128xf32>
    %c0_12 = arith.constant 0 : index
    %c0_13 = arith.constant 0 : index
    %26 = vector.load %arg2[%c0_12, %c0_13] : memref<1x128xf32, #tpu.memory_space<vmem>>, vector<1x128xf32>
    %27 = arith.addf %26, %17 : vector<1x128xf32>
    %28 = vector.broadcast %20 : f32 to vector<1x128xf32>
    %29 = arith.mulf %27, %28 : vector<1x128xf32>
    %30 = arith.mulf %25, %25 : vector<1x128xf32>
    %31 = arith.subf %29, %30 : vector<1x128xf32>
    %cst_14 = arith.constant 0.000000e+00 : f32
    %32 = vector.broadcast %cst_14 : f32 to vector<1x128xf32>
    %33 = arith.maximumf %31, %32 : vector<1x128xf32>
    %34 = math.sqrt %33 : vector<1x128xf32>
    %35 = vector.broadcast %21 : f32 to vector<1x128xf32>
    %36 = arith.maximumf %34, %35 : vector<1x128xf32>
    %cst_15 = arith.constant 1.000000e+00 : f32
    %37 = vector.broadcast %cst_15 : f32 to vector<1x128xf32>
    %38 = arith.divf %37, %36 : vector<1x128xf32>
    %39 = vector.broadcast %25 : vector<1x128xf32> to vector<4x128xf32>
    %40 = arith.subf %0, %39 : vector<4x128xf32>
    %41 = vector.broadcast %38 : vector<1x128xf32> to vector<4x128xf32>
    %42 = arith.mulf %40, %41 : vector<4x128xf32>
    %c0_16 = arith.constant 0 : index
    %c0_17 = arith.constant 0 : index
    %43 = vector.load %arg4[%c0_16, %c0_17] : memref<4x128xf32, #tpu.memory_space<vmem>>, vector<4x128xf32>
    tpu.vector_store %arg4[%c0_16, %c0_17], %42 {strides = array<i32>} : memref<4x128xf32, #tpu.memory_space<vmem>>, vector<4x128xf32>,
    return
  }
}

</mosaic_0001>

<llo_original>
// kernel: _fused_forward.1
$region0: #{_fused_forward.1}
  #allocation0 [shape = 'u32[]', space=smem, size = 0x4, offset = 0x4, fixed_abs, tag = 'smem constant byte address 0x4 - core index']
  #allocation1 [shape = 'u32[72,128]{1,0:T(1,128)}', space=vmem, size = 0x9000, scoped, tag = 'internal scratch']
  %s0 = inlined_call_operand.vmem [shape: f32[4,128], index: 0, kind: input, shape index: {}]
  %s1 = inlined_call_operand.vmem [shape: f32[1,128], index: 1, kind: input, shape index: {}]
  %s2 = inlined_call_operand.vmem [shape: f32[1,128], index: 2, kind: input, shape index: {}]
  %s3 = inlined_call_operand.vmem [shape: f32[2], index: 3, kind: input, shape index: {}]
  %s4 = inlined_call_operand.vmem [shape: f32[4,128], index: 4, kind: output, shape index: {0}]
  %s5 = inlined_call_operand.hbm [shape: f32[1,128], index: 5, kind: output, shape index: {1}]
  %s6 = inlined_call_operand.hbm [shape: f32[1,128], index: 6, kind: output, shape index: {2}]
  %7 = xla_tuple %s4, %s5, %s6
  %s8 = sld [smem:[#allocation0]]
  $region46: #{_fused_forward.1} parent=0
    _
  %s10 = ssub.s32 1, %s8
  %s11 = scalar_select 0, %s10, %s8
  $region1: #{_fused_forward.1} parent=0
    #allocation2 [shape = 'u8[512]{0}', space=smem, size = 0x200, scoped, tag = 'input window, operand 3, single buffered']
    #allocation3 [shape = 's32[1]{0}', space=sflag, size = 0x4, scoped, tag = 'scoped memory for _fused_forward.1']
    #allocation4 [shape = 's32[1]{0}', space=sflag, size = 0x4, scoped, tag = 'scoped memory for _fused_forward.1']
    #allocation5 [shape = 'u8[512]{0}', space=vmem, size = 0x400, scoped, tag = 'output window, operand 1, single buffered']
    #allocation6 [shape = 'u8[512]{0}', space=vmem, size = 0x400, scoped, tag = 'output window, operand 2, single buffered']
    #allocation7 [shape = 's32[1]{0}', space=sflag, size = 0x4, scoped, tag = 'scoped memory for _fused_forward.1']
    %12 = vsyncpa [#allocation4], 0
    %13 = vsyncpa [#allocation3], 0
    %14 = vsyncpa [#allocation7], 0
    // Predicated region
    $region2: #{_fused_forward.1} parent=1 // pred_check
      _
    $region3: #{_fused_forward.1} parent=1 // pred_check_branch
      %16 = sbr.rel (0) target = $region5
    $region4: #{_fused_forward.1} parent=1 // pred_region
      _
    $region5: #{_fused_forward.1} parent=1 // pred_fallthru
      _
    // Predicated region
    $region6: #{_fused_forward.1} parent=1 // pred_check
      _
    $region7: #{_fused_forward.1} parent=1 // pred_check_branch
      %18 = sbr.rel (0) target = $region9
    $region8: #{_fused_forward.1} parent=1 // pred_region
      _
    $region9: #{_fused_forward.1} parent=1 // pred_fallthru
      _
    // Predicated region
    $region10: #{_fused_forward.1} parent=1 // pred_check
      _
    $region11: #{_fused_forward.1} parent=1 // pred_check_branch
      %20 = sbr.rel (0) target = $region13
    $region12: #{_fused_forward.1} parent=1 // pred_region
      _
    $region13: #{_fused_forward.1} parent=1 // pred_fallthru
      _
    // Predicated region
    $region14: #{_fused_forward.1} parent=1 // pred_check
      _
    $region15: #{_fused_forward.1} parent=1 // pred_check_branch
      %22 = sbr.rel (0) target = $region17
    $region16: #{_fused_forward.1} parent=1 // pred_region
      %24 = vsyncadd [#allocation4], 0
      %s26 = sshll.u32 %s3, 4
      %s27 = int_to_ptr.vmem [resolvable:$true] %s26
      %29 = dma.vmem_to_smem %s27, 16, [#allocation2], [#allocation4]
    $region17: #{_fused_forward.1} parent=1 // pred_fallthru
      _
    // Predicated region
    $region18: #{_fused_forward.1} parent=1 // pred_check
      _
    $region19: #{_fused_forward.1} parent=1 // pred_check_branch
      %31 = sbr.rel (0) target = $region21
    $region20: #{_fused_forward.1} parent=1 // pred_region
      %33 = dma.done [#allocation4], 16
    $region21: #{_fused_forward.1} parent=1 // pred_fallthru
      _
    %34 = sfence
    %v35 = vld [vmem:[%s0] sm:$0xf]
    %vm36 = vcmask 1043456
    %v37 = vsel %vm36, %v35, 0.0
    %v38 = vrot.slane %v37, 4
    %v39 = vadd.f32 %v37, %v38
    %v40 = vrot.slane %v39, 2
    %v41 = vadd.f32 %v39, %v40
    %v42 = vrot.slane %v41, 1
    %v43 = vadd.f32 %v41, %v42
    %v44 = vmul.f32 %v35, %v35
    %v45 = vsel %vm36, %v44, 0.0
    %v46 = vrot.slane %v45, 4
    %v47 = vadd.f32 %v45, %v46
    %v48 = vrot.slane %v47, 2
    %v49 = vadd.f32 %v47, %v48
    %v50 = vrot.slane %v49, 1
    %v51 = vadd.f32 %v49, %v50
    %52 = vrot.lane.b32.xlu0 %v43, 32
    %v53 = vpop.permute.xlu0 %52
    %v54 = vadd.f32 %v43, %v53
    %55 = vrot.lane.b32.xlu0 %v51, 32
    %v56 = vpop.permute.xlu0 %55
    %v57 = vadd.f32 %v51, %v56
    %58 = vrot.lane.b32.xlu0 %v43, 64
    %v59 = vpop.permute.xlu0 %58
    %v60 = vadd.f32 %v54, %v59
    %61 = vrot.lane.b32.xlu0 %v51, 64
    %v62 = vpop.permute.xlu0 %61
    %v63 = vadd.f32 %v57, %v62
    %64 = vrot.lane.b32.xlu0 %v43, 96
    %v65 = vpop.permute.xlu0 %64
    %v66 = vadd.f32 %v60, %v65
    %67 = vrot.lane.b32.xlu0 %v51, 96
    %v68 = vpop.permute.xlu0 %67
    %v69 = vadd.f32 %v63, %v68
    %70 = vst [vmem:[#allocation5] sm:$0x1] %v66
    %71 = vst [vmem:[#allocation6] sm:$0x1] %v69
    %s72 = sld [smem:[#allocation2]]
    %s73 = sld [smem:[#allocation2 + $0x1]]
    %v74 = vld [vmem:[%s1] sm:$0x1]
    %v75 = vadd.f32 %v74, %v66
    %v76 = vstv %s72
    %v77 = vmul.f32 %v75, %v76
    %v78 = vld [vmem:[%s2] sm:$0x1]
    %v79 = vadd.f32 %v78, %v69
    %v80 = vmul.f32 %v79, %v76
    %v81 = vmul.f32 %v77, %v77
    %v82 = vsub.f32 %v80, %v81
    %v83 = vmax.f32 %v82, 0.0
    %v84 = vrsqrt.pop %v83
    %v85 = vmul.f32 %v84, %v83
    %v86 = vmul.f32 %v85, %v84
    %v87 = vmul.f32 0.5, %v86
    %v88 = vsub.f32 1.5, %v87
    %v89 = vmul.f32 %v84, %v88
    %v90 = vmul.f32 %v83, %v89
    %vm91 = vcmp.eq.f32.partialorder %v83, inf
    %v92 = vsel %vm91, %v83, %v90
    %vm93 = vcmp.eq.f32.partialorder %v83, 0.0
    %v94 = vand.u32 %v83, 2147483648
    %v95 = vsel %vm93, %v94, %v92
    %v96 = vstv %s73
    %v97 = vmax.f32 %v95, %v96
    %v98 = vrcp.pop %v97
    %v99 = vmul.f32 %v97, %v98
    %v100 = vsub.f32 1.0, %v99
    %v101 = vmul.f32 %v98, %v100
    %v102 = vadd.f32 %v98, %v101
    %vm103 = vweird.f32 %v97
    %vm104 = vweird.f32 %v98
    %vm105 = vmor %vm103, %vm104
    %v106 = vsel %vm105, %v98, %v102
    %v107 = vand.u32 2147483647, %v97
    %vm108 = vcmp.eq.f32.partialorder %v107, 8.507059e+37
    %v109 = vand.u32 %v97, 2147483648
    %v110 = vor.u32 1.1754944e-38, %v109
    %v111 = vsel %vm108, %v110, %v106
    %v112 = vmul.f32 1.0, %v111
    %v114 = vperm.slane %v77, 0
    %v116 = vsub.f32 %v35, %v114
    %v118 = vperm.slane %v112, 0
    %v120 = vmul.f32 %v116, %v118
    %121 = vst [vmem:[%s4] sm:$0xf] %v120
    // Predicated region
    $region22: #{_fused_forward.1} parent=1 // pred_check
      _
    $region23: #{_fused_forward.1} parent=1 // pred_check_branch
      %123 = sbr.rel (0) target = $region25
    $region24: #{_fused_forward.1} parent=1 // pred_region
      _
    $region25: #{_fused_forward.1} parent=1 // pred_fallthru
      _
    // Predicated region
    $region26: #{_fused_forward.1} parent=1 // pred_check
      _
    $region27: #{_fused_forward.1} parent=1 // pred_check_branch
      %125 = sbr.rel (0) target = $region29
    $region28: #{_fused_forward.1} parent=1 // pred_region
      %127 = vsyncadd [#allocation3], 0
      %s129 = sshll.u32 [#allocation5], 4
      %s130 = int_to_ptr.vmem [resolvable:$true] %s129
      %s131 = sshll.u32 %s5, 4
      %s132 = int_to_ptr.hbm [resolvable:$true] %s131
      %134 = dma.vmem_to_hbm [thread:$0]  %s130, 16, %s132, [#allocation3]
    $region29: #{_fused_forward.1} parent=1 // pred_fallthru
      _
    // Predicated region
    $region30: #{_fused_forward.1} parent=1 // pred_check
      _
    $region31: #{_fused_forward.1} parent=1 // pred_check_branch
      %136 = sbr.rel (0) target = $region33
    $region32: #{_fused_forward.1} parent=1 // pred_region
      %138 = vsyncadd [#allocation7], 0
      %s140 = sshll.u32 [#allocation6], 4
      %s141 = int_to_ptr.vmem [resolvable:$true] %s140
      %s142 = sshll.u32 %s6, 4
      %s143 = int_to_ptr.hbm [resolvable:$true] %s142
      %145 = dma.vmem_to_hbm [thread:$0]  %s141, 16, %s143, [#allocation7]
    $region33: #{_fused_forward.1} parent=1 // pred_fallthru
      _
    // Predicated region
    $region34: #{_fused_forward.1} parent=1 // pred_check
      _
    $region35: #{_fused_forward.1} parent=1 // pred_check_branch
      %147 = sbr.rel (0) target = $region37
    $region36: #{_fused_forward.1} parent=1 // pred_region
      _
    $region37: #{_fused_forward.1} parent=1 // pred_fallthru
      _
    // Predicated region
    $region38: #{_fused_forward.1} parent=1 // pred_check
      _
    $region39: #{_fused_forward.1} parent=1 // pred_check_branch
      %149 = sbr.rel (0) target = $region41
    $region40: #{_fused_forward.1} parent=1 // pred_region
      %151 = dma.done [#allocation3], 16
    $region41: #{_fused_forward.1} parent=1 // pred_fallthru
      _
    // Predicated region
    $region42: #{_fused_forward.1} parent=1 // pred_check
      _
    $region43: #{_fused_forward.1} parent=1 // pred_check_branch
      %153 = sbr.rel (0) target = $region45
    $region44: #{_fused_forward.1} parent=1 // pred_region
      %155 = dma.done [#allocation7], 16
    $region45: #{_fused_forward.1} parent=1 // pred_fallthru
      _
    %156 = vsyncpa [#allocation3], 1
    %157 = vsyncpa [#allocation7], 1
    %158 = vsyncpa [#allocation4], 1

</llo_original>
